<compile_context>
chip_gen: v6e
topology: v6e:2x2x1
jax: 0.10.0
libtpu: 0.0.40
codegen_flags: <defaults>
</compile_context>

<pallas_src>
import functools

import jax
import jax.numpy as jnp
from jax.experimental import pallas as pl
from jax.experimental.pallas import tpu as pltpu


def _round_up(x, m):
    return (x + m - 1) // m * m


def _cdiv(a, b):
    return (a + b - 1) // b


def _pick_tk(Kp, G):
    """Largest K tile (multiple of 128, dividing Kp) with <= ~8 MiB of bf16 weights."""
    for tk in (2048, 1024, 512, 256, 128):
        if Kp % tk == 0 and tk * G * 2 <= 8 * 1024 * 1024:
            return tk
    return 128


def _sigmoid_via_tanh(x):
    # sigmoid(x) == 0.5 * tanh(0.5 * x) + 0.5 : one EUP op instead of exp + recip.
    return 0.5 * jnp.tanh(0.5 * x) + 0.5


def lstm_cell_kernel(gi_ref, c_ref, w_ref, b_ref, c_out_ref, h_out_ref, z_acc):
    k = pl.program_id(1)

    @pl.when(k == 0)
    def _():
        # Initialise the accumulator with the bias (folds the bias add in).
        z_acc[...] = jnp.broadcast_to(b_ref[...], z_acc.shape)

    # Streamed K-tile of the single fused MXU pass (bf16 x bf16 -> f32).
    z_acc[...] += jnp.dot(gi_ref[...], w_ref[...],
                          preferred_element_type=jnp.float32)

    @pl.when(k == pl.num_programs(1) - 1)
    def _():
        Hp = c_out_ref.shape[1]
        z = z_acc[...]
        f = _sigmoid_via_tanh(z[:, 0 * Hp:1 * Hp])
        i = _sigmoid_via_tanh(z[:, 1 * Hp:2 * Hp])
        c_hat = jnp.tanh(z[:, 2 * Hp:3 * Hp])
        o = _sigmoid_via_tanh(z[:, 3 * Hp:4 * Hp])

        c_prev = c_ref[...]                      # f32
        c_next = f * c_prev + i * c_hat
        h_next = o * jnp.tanh(c_next)

        c_out_ref[...] = c_next
        h_out_ref[...] = h_next


def pack_lstm_params(w_x, w_h, b):
    """Pack gate weights/bias once (hoisted out of the per-call path).

    w_x: [I, 4H], w_h: [H, 4H], b: [1, 4H] in gate order (f, i, c, o).
    Returns w_packed [Kp, 4*Hp] bf16 and b_packed [1, 4*Hp] f32, where
    Kp = round_up(I + H, 128) and Hp = round_up(H, 128) if H >= 128 else H.
    """
    I = w_x.shape[0]
    H = w_h.shape[0]
    K = I + H
    Hp = _round_up(H, 128) if H >= 128 else H
    Kp = _round_up(K, 128)

    w = jnp.concatenate([w_x, w_h], axis=0).reshape(K, 4, H)
    w_packed = jnp.zeros((Kp, 4, Hp), jnp.float32).at[:K, :, :H].set(w)
    w_packed = w_packed.reshape(Kp, 4 * Hp).astype(jnp.bfloat16)

    b_packed = jnp.zeros((4, Hp), jnp.float32).at[:, :H].set(b.reshape(4, H))
    b_packed = b_packed.reshape(1, 4 * Hp)
    return w_packed, b_packed


@functools.partial(jax.jit, static_argnames=("block_b",))
def lstm_cell(x, cell_state, hidden, w_packed, b_packed, *, block_b=256):
    """Single LSTM-cell step with pre-packed weights (see pack_lstm_params)."""
    B, H = cell_state.shape
    I = x.shape[1]
    K = I + H
    Kp, G = w_packed.shape        # G = 4 * Hp
    Hp = G // 4

    # Batch tiling: multiple of 16 (bf16 sublane tile); prefer >= 2 batch tiles
    # so the "parallel" axis can shard across v7x's two TensorCores.
    two_tile_b = _round_up(_cdiv(B, 2), 16)
    TB = min(_round_up(block_b, 16), two_tile_b)
    Bp = _round_up(B, TB)

    TK = _pick_tk(Kp, G)

    # Fused, lane-aligned gate input [x | h] in bf16, zero-padded to (Bp, Kp).
    gi = jnp.concatenate([x, hidden], axis=1).astype(jnp.bfloat16)
    gi_p = jnp.zeros((Bp, Kp), jnp.bfloat16).at[:B, :K].set(gi)
    c_p = jnp.zeros((Bp, Hp), jnp.float32).at[:B, :H].set(
        cell_state.astype(jnp.float32))

    # Explicit scoped-VMEM budget: weights + gi + c + outputs (double-buffered)
    # + accumulator scratch, with headroom; clamped to stay valid on v7x.
    est = (2 * TK * G * 2          # weight tiles (bf16, double-buffered)
           + 2 * TB * TK * 2       # gate-input tiles (bf16)
           + 2 * TB * Hp * 4       # cell-state tiles (f32)
           + 2 * 2 * TB * Hp * 4   # two f32 output tiles
           + TB * G * 4            # z accumulator scratch
           + 2 * G * 4)            # bias
    vmem_limit = int(min(max(2 * est, 32 * 1024 * 1024), 56 * 1024 * 1024))

    c_out, h_out = pl.pallas_call(
        lstm_cell_kernel,
        out_shape=(jax.ShapeDtypeStruct((Bp, Hp), jnp.float32),
                   jax.ShapeDtypeStruct((Bp, Hp), jnp.float32)),
        grid=(Bp // TB, Kp // TK),
        in_specs=[
            pl.BlockSpec((TB, TK), lambda i, k: (i, k)),   # gate inputs (streamed)
            pl.BlockSpec((TB, Hp), lambda i, k: (i, 0)),   # cell state
            pl.BlockSpec((TK, G), lambda i, k: (k, 0)),    # packed weights (streamed)
            pl.BlockSpec((1, G), lambda i, k: (0, 0)),     # bias
        ],
        out_specs=(pl.BlockSpec((TB, Hp), lambda i, k: (i, 0)),
                   pl.BlockSpec((TB, Hp), lambda i, k: (i, 0))),
        scratch_shapes=[pltpu.VMEM((TB, G), jnp.float32)],
        compiler_params=pltpu.CompilerParams(
            dimension_semantics=("parallel", "arbitrary"),
            vmem_limit_bytes=vmem_limit),
    )(gi_p, c_p, w_packed, b_packed)

    # NOTE: carry c in f32 across timesteps to preserve the kernel's f32 carry.
    c_next = c_out[:B, :H].astype(cell_state.dtype)
    h_next = h_out[:B, :H].astype(hidden.dtype)
    return c_next, h_next


def init_params(key, input_size, hidden_size, dtype=jnp.float32):
    """Deterministic init mimicking nn.Linear default (U[-1/sqrt(fan_in), +])."""
    concat = input_size + hidden_size
    bound = 1.0 / (concat ** 0.5)
    keys = jax.random.split(key, 8)
    ws = [jax.random.uniform(keys[g], (concat, hidden_size), dtype,
                             minval=-bound, maxval=bound) for g in range(4)]
    bs = [jax.random.uniform(keys[4 + g], (hidden_size,), dtype,
                             minval=-bound, maxval=bound) for g in range(4)]
    w = jnp.concatenate(ws, axis=1)            # [concat, 4H], gate order f,i,c,o
    b = jnp.concatenate(bs, axis=0)[None, :]   # [1, 4H]
    w_x = w[:input_size, :]                    # [input_size, 4H]
    w_h = w[input_size:, :]                    # [hidden_size, 4H]
    return w_x, w_h, b


def lstm_cell_ref(x, cell_state, hidden, w_x, w_h, b):
    """Pure-JAX reference matching the PyTorch module semantics.

    Matmul inputs are quantized to bf16 (same as the kernel's MXU path) so the
    comparison isolates kernel correctness, not bf16 rounding.
    """
    H = cell_state.shape[1]
    gi = jnp.concatenate([x, hidden], axis=1).astype(jnp.bfloat16).astype(jnp.float32)
    w = jnp.concatenate([w_x, w_h], axis=0).astype(jnp.bfloat16).astype(jnp.float32)
    z = jnp.matmul(gi, w, precision=jax.lax.Precision.HIGHEST) + b
    f = jax.nn.sigmoid(z[:, 0 * H:1 * H])
    i = jax.nn.sigmoid(z[:, 1 * H:2 * H])
    c_hat = jnp.tanh(z[:, 2 * H:3 * H])
    o = jax.nn.sigmoid(z[:, 3 * H:4 * H])
    c_next = f * cell_state + i * c_hat
    h_next = o * jnp.tanh(c_next)
    return c_next, h_next


def _run_case(key, batch, input_size, hidden_size):
    k_x, k_c, k_h, k_p = jax.random.split(key, 4)
    x = jax.random.normal(k_x, (batch, input_size), jnp.float32)
    cell_state = jax.random.normal(k_c, (batch, hidden_size), jnp.float32)
    hidden = jax.random.normal(k_h, (batch, hidden_size), jnp.float32)
    w_x, w_h, b = init_params(k_p, input_size, hidden_size)
    w_packed, b_packed = pack_lstm_params(w_x, w_h, b)

    c_next, h_next = lstm_cell(x, cell_state, hidden, w_packed, b_packed)
    jax.block_until_ready((c_next, h_next))

    c_ref, h_ref = lstm_cell_ref(x, cell_state, hidden, w_x, w_h, b)
    assert jnp.allclose(c_next, c_ref, atol=2e-3), "cell state mismatch"
    assert jnp.allclose(h_next, h_ref, atol=2e-3), "hidden state mismatch"


if __name__ == "__main__":
    key = jax.random.PRNGKey(0)
    k0, k1 = jax.random.split(key)

    # Small-H path (gates contiguous in one 128-lane block), single K tile.
    _run_case(k0, batch=8, input_size=16, hidden_size=32)
    # Aligned-H path, multiple K tiles and multiple batch tiles.
    _run_case(k1, batch=40, input_size=128, hidden_size=256)

    print("KERNEL_OK")
</pallas_src>

<mosaic_0001>
module attributes {stable_mosaic.version = 11 : i64} {
  func.func @lstm_cell_kernel(%arg0: i32, %arg1: i32, %arg2: memref<16x128xbf16, #tpu.memory_space<vmem>>, %arg3: memref<16x32xf32, #tpu.memory_space<vmem>>, %arg4: memref<128x128xbf16, #tpu.memory_space<vmem>>, %arg5: memref<1x128xf32, #tpu.memory_space<vmem>>, %arg6: memref<16x32xf32, #tpu.memory_space<vmem>>, %arg7: memref<16x32xf32, #tpu.memory_space<vmem>>, %arg8: memref<16x128xf32, #tpu.memory_space<vmem>>) attributes {dimension_semantics = [#tpu.dimension_semantics<parallel>, #tpu.dimension_semantics<arbitrary>], iteration_bounds = array<i64: 1, 1>, scalar_prefetch = 0 : i64, scratch_operands = 1 : i64, tpu.core_type = #tpu.core_type<tc>, window_params = [{transform_indices = @transform_0, window_bounds = array<i64: 16, 128>}, {transform_indices = @transform_1, window_bounds = array<i64: 16, 32>}, {transform_indices = @transform_2, window_bounds = array<i64: 128, 128>}, {pipeline_mode = #tpu.pipeline_mode<synchronous>, transform_indices = @transform_3, window_bounds = array<i64: 1, 128>}, {transform_indices = @transform_4, window_bounds = array<i64: 16, 32>}, {transform_indices = @transform_5, window_bounds = array<i64: 16, 32>}]} {
    %c0_i32 = arith.constant 0 : i32
    %0 = arith.cmpi eq, %arg1, %c0_i32 : i32
    %1 = arith.extui %0 : i1 to i32
    %c0_i32_0 = arith.constant 0 : i32
    %2 = arith.cmpi ne, %1, %c0_i32_0 : i32
    scf.if %2 {
      %c0_10 = arith.constant 0 : index
      %c0_11 = arith.constant 0 : index
      %12 = vector.load %arg5[%c0_10, %c0_11] : memref<1x128xf32, #tpu.memory_space<vmem>>, vector<1x128xf32>
      %13 = vector.shape_cast %12 : vector<1x128xf32> to vector<1x128xf32>
      %14 = vector.broadcast %13 : vector<1x128xf32> to vector<16x128xf32>
      %c0_12 = arith.constant 0 : index
      %c0_13 = arith.constant 0 : index
      %15 = vector.load %arg8[%c0_12, %c0_13] : memref<16x128xf32, #tpu.memory_space<vmem>>, vector<16x128xf32>
      tpu.vector_store %arg8[%c0_12, %c0_13], %14 {strides = array<i32>} : memref<16x128xf32, #tpu.memory_space<vmem>>, vector<16x128xf32>,
    } else {
    }
    %c0 = arith.constant 0 : index
    %c0_1 = arith.constant 0 : index
    %3 = vector.load %arg8[%c0, %c0_1] : memref<16x128xf32, #tpu.memory_space<vmem>>, vector<16x128xf32>
    %c0_2 = arith.constant 0 : index
    %c0_3 = arith.constant 0 : index
    %4 = vector.load %arg2[%c0_2, %c0_3] : memref<16x128xbf16, #tpu.memory_space<vmem>>, vector<16x128xbf16>
    %c0_4 = arith.constant 0 : index
    %c0_5 = arith.constant 0 : index
    %5 = vector.load %arg4[%c0_4, %c0_5] : memref<128x128xbf16, #tpu.memory_space<vmem>>, vector<128x128xbf16>
    %cst = arith.constant dense<0.000000e+00> : vector<16x128xf32>
    %6 = tpu.matmul %4, %5, %cst {dimension_numbers = #tpu.dot_dimension_numbers<[1], [0], [0], [1], [0, 0, 1, 1], [], []>} : vector<16x128xbf16>, vector<128x128xbf16>, vector<16x128xf32> -> vector<16x128xf32>
    %7 = arith.addf %3, %6 : vector<16x128xf32>
    %c0_6 = arith.constant 0 : index
    %c0_7 = arith.constant 0 : index
    %8 = vector.load %arg8[%c0_6, %c0_7] : memref<16x128xf32, #tpu.memory_space<vmem>>, vector<16x128xf32>
    tpu.vector_store %arg8[%c0_6, %c0_7], %7 {strides = array<i32>} : memref<16x128xf32, #tpu.memory_space<vmem>>, vector<16x128xf32>,
    %c0_i32_8 = arith.constant 0 : i32
    %9 = arith.cmpi eq, %arg1, %c0_i32_8 : i32
    %10 = arith.extui %9 : i1 to i32
    %c0_i32_9 = arith.constant 0 : i32
    %11 = arith.cmpi ne, %10, %c0_i32_9 : i32
    scf.if %11 {
      %c0_10 = arith.constant 0 : index
      %c0_11 = arith.constant 0 : index
      %12 = vector.load %arg8[%c0_10, %c0_11] : memref<16x128xf32, #tpu.memory_space<vmem>>, vector<16x128xf32>
      %13 = vector.extract_strided_slice %12 {offsets = [0, 0], sizes = [16, 32], strides = [1, 1]} : vector<16x128xf32> to vector<16x32xf32>
      %cst_12 = arith.constant 5.000000e-01 : f32
      %14 = vector.broadcast %cst_12 : f32 to vector<16x32xf32>
      %15 = arith.mulf %14, %13 : vector<16x32xf32>
      %16 = math.tanh %15 : vector<16x32xf32>
      %cst_13 = arith.constant 5.000000e-01 : f32
      %17 = vector.broadcast %cst_13 : f32 to vector<16x32xf32>
      %18 = arith.mulf %17, %16 : vector<16x32xf32>
      %cst_14 = arith.constant 5.000000e-01 : f32
      %19 = vector.broadcast %cst_14 : f32 to vector<16x32xf32>
      %20 = arith.addf %18, %19 : vector<16x32xf32>
      %21 = vector.extract_strided_slice %12 {offsets = [0, 32], sizes = [16, 32], strides = [1, 1]} : vector<16x128xf32> to vector<16x32xf32>
      %cst_15 = arith.constant 5.000000e-01 : f32
      %22 = vector.broadcast %cst_15 : f32 to vector<16x32xf32>
      %23 = arith.mulf %22, %21 : vector<16x32xf32>
      %24 = math.tanh %23 : vector<16x32xf32>
      %cst_16 = arith.constant 5.000000e-01 : f32
      %25 = vector.broadcast %cst_16 : f32 to vector<16x32xf32>
      %26 = arith.mulf %25, %24 : vector<16x32xf32>
      %cst_17 = arith.constant 5.000000e-01 : f32
      %27 = vector.broadcast %cst_17 : f32 to vector<16x32xf32>
      %28 = arith.addf %26, %27 : vector<16x32xf32>
      %29 = vector.extract_strided_slice %12 {offsets = [0, 64], sizes = [16, 32], strides = [1, 1]} : vector<16x128xf32> to vector<16x32xf32>
      %30 = math.tanh %29 : vector<16x32xf32>
      %31 = vector.extract_strided_slice %12 {offsets = [0, 96], sizes = [16, 32], strides = [1, 1]} : vector<16x128xf32> to vector<16x32xf32>
      %cst_18 = arith.constant 5.000000e-01 : f32
      %32 = vector.broadcast %cst_18 : f32 to vector<16x32xf32>
      %33 = arith.mulf %32, %31 : vector<16x32xf32>
      %34 = math.tanh %33 : vector<16x32xf32>
      %cst_19 = arith.constant 5.000000e-01 : f32
      %35 = vector.broadcast %cst_19 : f32 to vector<16x32xf32>
      %36 = arith.mulf %35, %34 : vector<16x32xf32>
      %cst_20 = arith.constant 5.000000e-01 : f32
      %37 = vector.broadcast %cst_20 : f32 to vector<16x32xf32>
      %38 = arith.addf %36, %37 : vector<16x32xf32>
      %c0_21 = arith.constant 0 : index
      %c0_22 = arith.constant 0 : index
      %39 = vector.load %arg3[%c0_21, %c0_22] : memref<16x32xf32, #tpu.memory_space<vmem>>, vector<16x32xf32>
      %40 = arith.mulf %20, %39 : vector<16x32xf32>
      %41 = arith.mulf %28, %30 : vector<16x32xf32>
      %42 = arith.addf %40, %41 : vector<16x32xf32>
      %43 = math.tanh %42 : vector<16x32xf32>
      %44 = arith.mulf %38, %43 : vector<16x32xf32>
      %c0_23 = arith.constant 0 : index
      %c0_24 = arith.constant 0 : index
      %45 = vector.load %arg6[%c0_23, %c0_24] : memref<16x32xf32, #tpu.memory_space<vmem>>, vector<16x32xf32>
      tpu.vector_store %arg6[%c0_23, %c0_24], %42 {strides = array<i32>} : memref<16x32xf32, #tpu.memory_space<vmem>>, vector<16x32xf32>,
      %c0_25 = arith.constant 0 : index
      %c0_26 = arith.constant 0 : index
      %46 = vector.load %arg7[%c0_25, %c0_26] : memref<16x32xf32, #tpu.memory_space<vmem>>, vector<16x32xf32>
      tpu.vector_store %arg7[%c0_25, %c0_26], %44 {strides = array<i32>} : memref<16x32xf32, #tpu.memory_space<vmem>>, vector<16x32xf32>,
    } else {
    }
    return
  }
  func.func @transform_0(%arg0: i32, %arg1: i32) -> (i32, i32) {
    %c0_i32 = arith.constant 0 : i32
    return %arg0, %arg1 : i32, i32
  }
  func.func @transform_1(%arg0: i32, %arg1: i32) -> (i32, i32) {
    %c0_i32 = arith.constant 0 : i32
    %c0_i32_0 = arith.constant 0 : i32
    return %arg0, %c0_i32 : i32, i32
  }
  func.func @transform_2(%arg0: i32, %arg1: i32) -> (i32, i32) {
    %c0_i32 = arith.constant 0 : i32
    %c0_i32_0 = arith.constant 0 : i32
    return %arg1, %c0_i32 : i32, i32
  }
  func.func @transform_3(%arg0: i32, %arg1: i32) -> (i32, i32) {
    %c0_i32 = arith.constant 0 : i32
    %c0_i32_0 = arith.constant 0 : i32
    %c0_i32_1 = arith.constant 0 : i32
    return %c0_i32, %c0_i32_0 : i32, i32
  }
  func.func @transform_4(%arg0: i32, %arg1: i32) -> (i32, i32) {
    %c0_i32 = arith.constant 0 : i32
    %c0_i32_0 = arith.constant 0 : i32
    return %arg0, %c0_i32 : i32, i32
  }
  func.func @transform_5(%arg0: i32, %arg1: i32) -> (i32, i32) {
    %c0_i32 = arith.constant 0 : i32
    %c0_i32_0 = arith.constant 0 : i32
    return %arg0, %c0_i32 : i32, i32
  }
}

</mosaic_0001>

<llo_original>
// kernel: lstm_cell.1
$region0: #{lstm_cell.1}
  #allocation0 [shape = 'u32[]', space=smem, size = 0x4, offset = 0x4, fixed_abs, tag = 'smem constant byte address 0x4 - core index']
  #allocation1 [shape = 'u32[144,128]{1,0:T(1,128)}', space=vmem, size = 0x12000, scoped, tag = 'internal scratch']
  #allocation2 [shape = 'f32[16,128]{1,0:T(8,128)}', space=vmem, size = 0x2000, scoped, tag = 'scratch operand']
  %s0 = inlined_call_operand.vmem [shape: bf16[16,128], index: 0, kind: input, shape index: {}]
  %s1 = inlined_call_operand.vmem [shape: f32[16,32], index: 1, kind: input, shape index: {}]
  %s2 = inlined_call_operand.vmem [shape: bf16[128,128], index: 2, kind: input, shape index: {}]
  %s3 = inlined_call_operand.vmem [shape: f32[1,128], index: 3, kind: input, shape index: {}]
  %s4 = inlined_call_operand.vmem [shape: f32[16,32], index: 4, kind: output, shape index: {0}]
  %s5 = inlined_call_operand.vmem [shape: f32[16,32], index: 5, kind: output, shape index: {1}]
  %6 = xla_tuple %s4, %s5
  %s7 = sld [smem:[#allocation0]]
  $region42: #{lstm_cell.1} parent=0
    _
  %s9 = ssub.s32 1, %s7
  %s10 = scalar_select 0, %s9, %s7
  // Predicated region
  $region2: #{lstm_cell.1} parent=0 // pred_check
    _
  $region3: #{lstm_cell.1} parent=0 // pred_check_branch
    %12 = sbr.rel (0) target = $region5
  $region4: #{lstm_cell.1} parent=0 // pred_region
    _
  $region5: #{lstm_cell.1} parent=0 // pred_fallthru
    _
  // Predicated region
  $region6: #{lstm_cell.1} parent=0 // pred_check
    _
  $region7: #{lstm_cell.1} parent=0 // pred_check_branch
    %14 = sbr.rel (0) target = $region9
  $region8: #{lstm_cell.1} parent=0 // pred_region
    _
  $region9: #{lstm_cell.1} parent=0 // pred_fallthru
    _
  // Predicated region
  $region10: #{lstm_cell.1} parent=0 // pred_check
    _
  $region11: #{lstm_cell.1} parent=0 // pred_check_branch
    %16 = sbr.rel (0) target = $region13
  $region12: #{lstm_cell.1} parent=0 // pred_region
    _
  $region13: #{lstm_cell.1} parent=0 // pred_fallthru
    _
  // Predicated region
  $region14: #{lstm_cell.1} parent=0 // pred_check
    _
  $region15: #{lstm_cell.1} parent=0 // pred_check_branch
    %18 = sbr.rel (0) target = $region17
  $region16: #{lstm_cell.1} parent=0 // pred_region
    _
  $region17: #{lstm_cell.1} parent=0 // pred_fallthru
    _
  %p20 = scmp.eq.s32.totalorder 0, 0
  // Predicated region
  $region18: #{lstm_cell.1} parent=0 // pred_check
    %p21 = pneg %p20
  $region19: #{lstm_cell.1} parent=0 // pred_check_branch
    %23 = sbr.rel (%p21) target = $region21
  $region20: #{lstm_cell.1} parent=0 // pred_region
    %v24 = vld [vmem:[%s3] sm:$0x1]
    %v26 = vlaneseq
    %v27 = vshrl.u32 %v26, 7
    %v28 = vsub.s32 0, %v27
    %v29 = vrot.slane %v24, %v28
    %31 = vst [vmem:[#allocation2] sm:$0xff] %v29
    %32 = vst [vmem:[#allocation2 + $0x8] sm:$0xff] %v29
  $region21: #{lstm_cell.1} parent=0 // pred_fallthru
    _
  %v33 = vld [vmem:[#allocation2] sm:$0xff]
  %v34 = vld [vmem:[#allocation2 + $0x8] sm:$0xff]
  %v35 = vld [vmem:[%s0] sm:$0xf]
  %v36 = vld [vmem:[%s0 + $0x4] sm:$0xf]
  %v37 = vld [vmem:[%s2] sm:$0xf]
  %v38 = vld [vmem:[%s2 + $0x4] sm:$0xf]
  %v39 = vld [vmem:[%s2 + $0x8] sm:$0xf]
  %v40 = vld [vmem:[%s2 + $0xc] sm:$0xf]
  %v41 = vld [vmem:[%s2 + $0x10] sm:$0xf]
  %v42 = vld [vmem:[%s2 + $0x14] sm:$0xf]
  %v43 = vld [vmem:[%s2 + $0x18] sm:$0xf]
  %v44 = vld [vmem:[%s2 + $0x1c] sm:$0xf]
  %v45 = vld [vmem:[%s2 + $0x20] sm:$0xf]
  %v46 = vld [vmem:[%s2 + $0x24] sm:$0xf]
  %v47 = vld [vmem:[%s2 + $0x28] sm:$0xf]
  %v48 = vld [vmem:[%s2 + $0x2c] sm:$0xf]
  %v49 = vld [vmem:[%s2 + $0x30] sm:$0xf]
  %v50 = vld [vmem:[%s2 + $0x34] sm:$0xf]
  %v51 = vld [vmem:[%s2 + $0x38] sm:$0xf]
  %v52 = vld [vmem:[%s2 + $0x3c] sm:$0xf]
  %v55 = vunpack.c.l.b16 %v35
  %v56 = vunpack.c.l.b16 %v36
  %v57 = vpack.c.b16 %v56, %v55
  %v75 = vunpack.c.l.b16 %v37
  %v76 = vunpack.c.l.b16 %v38
  %v77 = vunpack.c.l.b16 %v39
  %v78 = vunpack.c.l.b16 %v40
  %v79 = vunpack.c.l.b16 %v41
  %v80 = vunpack.c.l.b16 %v42
  %v81 = vunpack.c.l.b16 %v43
  %v82 = vunpack.c.l.b16 %v44
  %v83 = vunpack.c.l.b16 %v45
  %v84 = vunpack.c.l.b16 %v46
  %v85 = vunpack.c.l.b16 %v47
  %v86 = vunpack.c.l.b16 %v48
  %v87 = vunpack.c.l.b16 %v49
  %v88 = vunpack.c.l.b16 %v50
  %v89 = vunpack.c.l.b16 %v51
  %v90 = vunpack.c.l.b16 %v52
  %v91 = vpack.c.b16 %v76, %v75
  %v92 = vpack.c.b16 %v78, %v77
  %v93 = vpack.c.b16 %v80, %v79
  %v94 = vpack.c.b16 %v82, %v81
  %v95 = vpack.c.b16 %v84, %v83
  %v96 = vpack.c.b16 %v86, %v85
  %v97 = vpack.c.b16 %v88, %v87
  %v98 = vpack.c.b16 %v90, %v89
  %107 = vmatprep.subr.bf16.mxu0 0
  %108 = vmatpush1.bf16.msra.mxu0 %v98
  %109 = vmatprep.subr.bf16.mxu0 0
  %110 = vmatpush1.bf16.msra.mxu0 %v97
  %111 = vmatprep.subr.bf16.mxu0 0
  %112 = vmatpush1.bf16.msra.mxu0 %v96
  %113 = vmatprep.subr.bf16.mxu0 0
  %114 = vmatpush1.bf16.msra.mxu0 %v95
  %115 = vmatprep.subr.bf16.mxu0 0
  %116 = vmatpush1.bf16.msra.mxu0 %v94
  %117 = vmatprep.subr.bf16.mxu0 0
  %118 = vmatpush1.bf16.msra.mxu0 %v93
  %119 = vmatprep.subr.bf16.mxu0 0
  %120 = vmatpush1.bf16.msra.mxu0 %v92
  %121 = vmatprep.subr.bf16.mxu0 0
  %122 = vmatpush1.bf16.msra.mxu0 %v91
  %123 = vmatprep.subr.bf16.mxu0 0
  %124 = vmatpush2.bf16.msra.mxu0 0
  %125 = vmatprep.subr.bf16.mxu0 0
  %126 = vmatpush2.bf16.msra.mxu0 0
  %127 = vmatprep.subr.bf16.mxu0 0
  %128 = vmatpush2.bf16.msra.mxu0 0
  %129 = vmatprep.subr.bf16.mxu0 0
  %130 = vmatpush2.bf16.msra.mxu0 0
  %131 = vmatprep.subr.bf16.mxu0 0
  %132 = vmatpush2.bf16.msra.mxu0 0
  %133 = vmatprep.subr.bf16.mxu0 0
  %134 = vmatpush2.bf16.msra.mxu0 0
  %135 = vmatprep.subr.bf16.mxu0 0
  %136 = vmatpush2.bf16.msra.mxu0 0
  %137 = vmatprep.subr.bf16.mxu0 0
  %138 = vmatpush2.bf16.msra.mxu0 0
  %139 = vmatprep.mubr.bf16.mxu0 0
  %140 = vmatmul.mubr.bf16.gmra.mxu0 %v57
  %v141 = vpop.f32.mrf.mxu0
  %v142 = vadd.f32 0.0, %v141
  %v143 = vpop.f32.mrf.mxu0
  %v144 = vpop.f32.mrf.mxu0
  %v145 = vadd.f32 0.0, %v144
  %v146 = vpop.f32.mrf.mxu0
  %147 = vdwg.mxu0
  %v148 = vadd.f32 %v33, %v142
  %v149 = vadd.f32 %v34, %v145
  %150 = vst [vmem:[#allocation2] sm:$0xff] %v148
  %151 = vst [vmem:[#allocation2 + $0x8] sm:$0xff] %v149
  // Predicated region
  $region22: #{lstm_cell.1} parent=0 // pred_check
    %p152 = pneg %p20
  $region23: #{lstm_cell.1} parent=0 // pred_check_branch
    %154 = sbr.rel (%p152) target = $region25
  $region24: #{lstm_cell.1} parent=0 // pred_region
    %v155 = vld [vmem:[#allocation2] sm:$0xff]
    %v156 = vld [vmem:[#allocation2 + $0x8] sm:$0xff]
    %v157 = vmul.f32 %v155, 0.5
    %v158 = vmul.f32 %v156, 0.5
    %v159 = vtanh.pop %v157
    %v160 = vtanh.pop %v158
    %v161 = vmul.f32 %v159, 0.5
    %v162 = vmul.f32 %v160, 0.5
    %v163 = vadd.f32 %v161, 0.5
    %v164 = vadd.f32 %v162, 0.5
    %v165 = vtanh.pop %v155
    %v166 = vtanh.pop %v156
    %v167 = vld [vmem:[%s1] sm:$0xff]
    %v168 = vld [vmem:[%s1 + $0x8] sm:$0xff]
    %v169 = vmul.f32 %v163, %v167
    %v170 = vmul.f32 %v164, %v168
    %173 = vrot.lane.b32.xlu0 %v165, 96
    %v174 = vpop.permute.xlu0 %173
    %175 = vrot.lane.b32.xlu0 %v166, 96
    %v176 = vpop.permute.xlu0 %175
    %v179 = vmul.f32 %v163, %v174
    %v180 = vmul.f32 %v164, %v176
    %183 = vrot.lane.b32.xlu0 %v179, 96
    %v184 = vpop.permute.xlu0 %183
    %185 = vrot.lane.b32.xlu0 %v180, 96
    %v186 = vpop.permute.xlu0 %185
    %v189 = vadd.f32 %v169, %v184
    %v190 = vadd.f32 %v170, %v186
    %v191 = vtanh.pop %v189
    %v192 = vtanh.pop %v190
    %195 = vrot.lane.b32.xlu0 %v191, 96
    %v196 = vpop.permute.xlu0 %195
    %197 = vrot.lane.b32.xlu0 %v192, 96
    %v198 = vpop.permute.xlu0 %197
    %v201 = vmul.f32 %v163, %v196
    %v202 = vmul.f32 %v164, %v198
    %vm203 = vcmask 261120
    %204 = vst.msk [vmem:[%s4] sm:$0xff] %vm203, %v189
    %205 = vst.msk [vmem:[%s4 + $0x8] sm:$0xff] %vm203, %v190
    %208 = vrot.lane.b32.xlu0 %v201, 32
    %v209 = vpop.permute.xlu0 %208
    %210 = vrot.lane.b32.xlu0 %v202, 32
    %v211 = vpop.permute.xlu0 %210
    %214 = vst.msk [vmem:[%s5] sm:$0xff] %vm203, %v209
    %215 = vst.msk [vmem:[%s5 + $0x8] sm:$0xff] %vm203, %v211
  $region25: #{lstm_cell.1} parent=0 // pred_fallthru
    _
  // Predicated region
  $region26: #{lstm_cell.1} parent=0 // pred_check
    _
  $region27: #{lstm_cell.1} parent=0 // pred_check_branch
    %217 = sbr.rel (0) target = $region29
  $region28: #{lstm_cell.1} parent=0 // pred_region
    _
  $region29: #{lstm_cell.1} parent=0 // pred_fallthru
    _
  // Predicated region
  $region30: #{lstm_cell.1} parent=0 // pred_check
    _
  $region31: #{lstm_cell.1} parent=0 // pred_check_branch
    %219 = sbr.rel (0) target = $region33
  $region32: #{lstm_cell.1} parent=0 // pred_region
    _
  $region33: #{lstm_cell.1} parent=0 // pred_fallthru
    _
  // Predicated region
  $region34: #{lstm_cell.1} parent=0 // pred_check
    _
  $region35: #{lstm_cell.1} parent=0 // pred_check_branch
    %221 = sbr.rel (0) target = $region37
  $region36: #{lstm_cell.1} parent=0 // pred_region
    _
  $region37: #{lstm_cell.1} parent=0 // pred_fallthru
    _
  // Predicated region
  $region38: #{lstm_cell.1} parent=0 // pred_check
    _
  $region39: #{lstm_cell.1} parent=0 // pred_check_branch
    %223 = sbr.rel (0) target = $region41
  $region40: #{lstm_cell.1} parent=0 // pred_region
    _
  $region41: #{lstm_cell.1} parent=0 // pred_fallthru
    _

</llo_original>
